<compile_context>
chip_gen: v7x
topology: tpu7x:2x2x1
jax: 0.10.0
libtpu: 0.0.40
codegen_flags: <defaults>
</compile_context>

<pallas_src>
import jax
import jax.numpy as jnp
from jax import lax
from jax.experimental import pallas as pl
from jax.experimental.pallas import tpu as pltpu


KH = KW = 3


def _make_feature_kernel(H, W):
    """Returns the fused conv3x3 + ReLU + global-avg-pool + linear kernel."""
    WP = W + 2           # padded row width
    Q = H * WP           # per-image output lanes (includes 2 junk cols per row)

    def kernel(x_ref, w1_ref, b1_ref, mask_ref, w2_ref, b2_ref, o_ref):
        # x_ref   : (1, C, PF) f32  zero-padded image, spatial flattened (+ tail pad)
        # w1_ref  : (F, C*KH*KW) f32  conv weight as matmul, (dy,dx)-major / c-minor
        # b1_ref  : (F, 1)   f32
        # mask_ref: (1, Q)   f32  valid-column mask with 1/(H*W) folded in
        # w2_ref  : (F, D)   f32
        # b2_ref  : (1, D)   f32
        # o_ref   : (1, 1, D) f32
        x = x_ref[0]                                        # (C, PF)

        # In-kernel im2col: tap (dy, dx) of the 3x3 conv is a contiguous lane
        # slice of the flattened padded image.  The 2 extra columns per row are
        # junk and are zeroed out by the pooling mask below.
        taps = []
        for dy in range(KH):
            for dx in range(KW):
                off = dy * WP + dx
                taps.append(x[:, off:off + Q])              # (C, Q)
        patches = jnp.concatenate(taps, axis=0)             # (C*KH*KW, Q)

        # Conv as one matmul on the MXU, f32 accumulation.
        h = jnp.dot(w1_ref[...], patches,
                    preferred_element_type=jnp.float32)     # (F, Q)
        h = jnp.maximum(h + b1_ref[...], 0.0)               # bias + ReLU (VPU)

        # Global average pool: masked lane reduction (XLU slot, not VPU);
        # 1/(H*W) is folded into the mask -> no separate divide.
        pooled = jnp.sum(h * mask_ref[...], axis=-1, keepdims=True)   # (F, 1)

        # Final projection for this batch element.  F, D are small (32), so a
        # broadcast-multiply + sublane sum is cheaper/safer than an M=1 matmul.
        z = jnp.sum(pooled * w2_ref[...], axis=0, keepdims=True)      # (1, D)
        o_ref[0] = z + b2_ref[...]

    return kernel


def get_features(x, w1, b1, w2, b2):
    """Feature extractor for a (possibly fused) batch.

    x : (NB, C, H, W) images
    w1: (F, C, KH, KW) conv weight (PyTorch OIHW order), b1: (F,)
    w2: (F, D) linear weight, b2: (D,)
    returns (NB, D) features.
    """
    nb, c, h, w = x.shape
    f = w1.shape[0]
    d = w2.shape[1]
    wp = w + 2
    p = (h + 2) * wp
    pf = p + (KW - 1)          # tail pad so the largest tap slice stays in-bounds
    q = h * wp
    ckk = c * KH * KW

    # XLA glue (1x image traffic): zero pad for SAME conv, flatten spatial dims,
    # and append KW-1 zeros so every tap slice [off, off+Q) is in-bounds.
    xp = jnp.pad(x.astype(jnp.float32), ((0, 0), (0, 0), (1, 1), (1, 1)))
    xp = xp.reshape(nb, c, p)
    xp = jnp.pad(xp, ((0, 0), (0, 0), (0, KW - 1)))          # (NB, C, PF)

    # Conv weight as a matmul; row order (dy, dx)-major / channel-minor must
    # match the kernel's tap concatenation order.
    w1col = jnp.transpose(w1, (0, 2, 3, 1)).reshape(f, ckk).astype(jnp.float32)
    b1c = b1.reshape(f, 1).astype(jnp.float32)
    b2r = b2.reshape(1, d).astype(jnp.float32)
    w2f = w2.astype(jnp.float32)

    # Pooling mask: average only the W valid columns of each (W+2)-wide row.
    cols = jnp.arange(q, dtype=jnp.int32) % wp
    mask = jnp.where(cols < w, 1.0 / (h * w), 0.0).astype(jnp.float32)
    mask = mask.reshape(1, q)

    kernel = _make_feature_kernel(h, w)

    flops = 2 * nb * (f * ckk * q + f * d)
    bytes_accessed = 4 * (nb * c * pf + f * ckk + f + q + f * d + d + nb * d)

    out = pl.pallas_call(
        kernel,
        out_shape=jax.ShapeDtypeStruct((nb, 1, d), jnp.float32),
        grid=(nb,),
        in_specs=[
            pl.BlockSpec((1, c, pf), lambda b: (b, 0, 0)),   # per-batch image
            pl.BlockSpec((f, ckk), lambda b: (0, 0)),        # resident weights
            pl.BlockSpec((f, 1), lambda b: (0, 0)),
            pl.BlockSpec((1, q), lambda b: (0, 0)),
            pl.BlockSpec((f, d), lambda b: (0, 0)),
            pl.BlockSpec((1, d), lambda b: (0, 0)),
        ],
        out_specs=pl.BlockSpec((1, 1, d), lambda b: (b, 0, 0)),
        compiler_params=pltpu.CompilerParams(
            dimension_semantics=("parallel",),
            vmem_limit_bytes=32 * 1024 * 1024),
        cost_estimate=pl.CostEstimate(
            flops=flops, transcendentals=0, bytes_accessed=bytes_accessed),
    )(xp, w1col, b1c, mask, w2f, b2r)
    return out.reshape(nb, d)


def barlow_twins_forward(y_a, y_b, params):
    """BarlowTwinsModel.forward: returns (z_a, z_b)."""
    w1, b1, w2, b2 = params
    b = y_a.shape[0]
    x = jnp.concatenate([y_a, y_b], axis=0)     # fuse both views: one kernel call
    z = get_features(x, w1, b1, w2, b2)         # (2B, D)
    return z[:b], z[b:]


def _reference_forward(y_a, y_b, params):
    """Pure-JAX reference using a real SAME conv (validates padding/flatten order)."""
    w1, b1, w2, b2 = params

    def feat(x):
        h = lax.conv_general_dilated(
            x.astype(jnp.float32), w1.astype(jnp.float32),
            window_strides=(1, 1), padding="SAME",
            dimension_numbers=("NCHW", "OIHW", "NCHW"))          # (B, F, H, W)
        h = jnp.maximum(h + b1.reshape(1, -1, 1, 1), 0.0)
        pooled = h.mean(axis=(2, 3))                             # (B, F)
        return pooled @ w2 + b2.reshape(1, -1)

    return feat(y_a), feat(y_b)


if __name__ == "__main__":
    # Small shapes: batch=2, channels=4, spatial=16x16, conv filters=32, feat dim=32
    B, C, H, W = 2, 4, 16, 16
    F = 32
    D = 32

    key = jax.random.PRNGKey(0)
    k_ya, k_yb, k_w1, k_b1, k_w2, k_b2 = jax.random.split(key, 6)

    y_a = jax.random.normal(k_ya, (B, C, H, W), dtype=jnp.float32)
    y_b = jax.random.normal(k_yb, (B, C, H, W), dtype=jnp.float32)

    # Deterministic parameter init (conv weight in PyTorch OIHW layout).
    w1 = jax.random.normal(k_w1, (F, C, KH, KW), dtype=jnp.float32) * 0.1
    b1 = jax.random.normal(k_b1, (F,), dtype=jnp.float32) * 0.01
    w2 = jax.random.normal(k_w2, (F, D), dtype=jnp.float32) * 0.1
    b2 = jax.random.normal(k_b2, (D,), dtype=jnp.float32) * 0.01
    params = (w1, b1, w2, b2)

    fwd = jax.jit(barlow_twins_forward)
    z_a, z_b = fwd(y_a, y_b, params)
    jax.block_until_ready((z_a, z_b))

    # Sanity check against a pure-JAX reference (all f32).
    ra, rb = _reference_forward(y_a, y_b, params)
    assert z_a.shape == (B, D) and z_b.shape == (B, D)
    assert jnp.allclose(z_a, ra, atol=1e-3, rtol=1e-3), float(jnp.max(jnp.abs(z_a - ra)))
    assert jnp.allclose(z_b, rb, atol=1e-3, rtol=1e-3), float(jnp.max(jnp.abs(z_b - rb)))

    print("KERNEL_OK")
</pallas_src>

<mosaic_0001>
module attributes {stable_mosaic.version = 11 : i64} {
  func.func @kernel(%arg0: i32, %arg1: memref<1x4x326xf32, #tpu.memory_space<vmem>>, %arg2: memref<32x36xf32, #tpu.memory_space<vmem>>, %arg3: memref<32x1xf32, #tpu.memory_space<vmem>>, %arg4: memref<1x288xf32, #tpu.memory_space<vmem>>, %arg5: memref<32x32xf32, #tpu.memory_space<vmem>>, %arg6: memref<1x32xf32, #tpu.memory_space<vmem>>, %arg7: memref<1x1x32xf32, #tpu.memory_space<vmem>>) attributes {dimension_semantics = [#tpu.dimension_semantics<parallel>], iteration_bounds = array<i64: 4>, scalar_prefetch = 0 : i64, scratch_operands = 0 : i64, tpu.core_type = #tpu.core_type<tc>, window_params = [{transform_indices = @transform_0, window_bounds = array<i64: 1, 4, 326>}, {pipeline_mode = #tpu.pipeline_mode<synchronous>, transform_indices = @transform_1, window_bounds = array<i64: 32, 36>}, {pipeline_mode = #tpu.pipeline_mode<synchronous>, transform_indices = @transform_2, window_bounds = array<i64: 32, 1>}, {pipeline_mode = #tpu.pipeline_mode<synchronous>, transform_indices = @transform_3, window_bounds = array<i64: 1, 288>}, {pipeline_mode = #tpu.pipeline_mode<synchronous>, transform_indices = @transform_4, window_bounds = array<i64: 32, 32>}, {pipeline_mode = #tpu.pipeline_mode<synchronous>, transform_indices = @transform_5, window_bounds = array<i64: 1, 32>}, {transform_indices = @transform_6, window_bounds = array<i64: 1, 1, 32>}]} {
    %c0 = arith.constant 0 : index
    %c0_0 = arith.constant 0 : index
    %c0_1 = arith.constant 0 : index
    %0 = vector.load %arg1[%c0, %c0_0, %c0_1] : memref<1x4x326xf32, #tpu.memory_space<vmem>>, vector<1x4x326xf32>
    %1 = vector.shape_cast %0 : vector<1x4x326xf32> to vector<4x326xf32>
    %2 = vector.extract_strided_slice %1 {offsets = [0, 0], sizes = [4, 288], strides = [1, 1]} : vector<4x326xf32> to vector<4x288xf32>
    %3 = vector.extract_strided_slice %1 {offsets = [0, 1], sizes = [4, 288], strides = [1, 1]} : vector<4x326xf32> to vector<4x288xf32>
    %4 = vector.extract_strided_slice %1 {offsets = [0, 2], sizes = [4, 288], strides = [1, 1]} : vector<4x326xf32> to vector<4x288xf32>
    %5 = vector.extract_strided_slice %1 {offsets = [0, 18], sizes = [4, 288], strides = [1, 1]} : vector<4x326xf32> to vector<4x288xf32>
    %6 = vector.extract_strided_slice %1 {offsets = [0, 19], sizes = [4, 288], strides = [1, 1]} : vector<4x326xf32> to vector<4x288xf32>
    %7 = vector.extract_strided_slice %1 {offsets = [0, 20], sizes = [4, 288], strides = [1, 1]} : vector<4x326xf32> to vector<4x288xf32>
    %8 = vector.extract_strided_slice %1 {offsets = [0, 36], sizes = [4, 288], strides = [1, 1]} : vector<4x326xf32> to vector<4x288xf32>
    %9 = vector.extract_strided_slice %1 {offsets = [0, 37], sizes = [4, 288], strides = [1, 1]} : vector<4x326xf32> to vector<4x288xf32>
    %10 = vector.extract_strided_slice %1 {offsets = [0, 38], sizes = [4, 288], strides = [1, 1]} : vector<4x326xf32> to vector<4x288xf32>
    %11 = tpu.concatenate %2, %3, %4, %5, %6, %7, %8, %9, %10 in 0 : vector<4x288xf32>, vector<4x288xf32>, vector<4x288xf32>, vector<4x288xf32>, vector<4x288xf32>, vector<4x288xf32>, vector<4x288xf32>, vector<4x288xf32>, vector<4x288xf32> -> vector<36x288xf32>
    %c0_2 = arith.constant 0 : index
    %c0_3 = arith.constant 0 : index
    %12 = vector.load %arg2[%c0_2, %c0_3] : memref<32x36xf32, #tpu.memory_space<vmem>>, vector<32x36xf32>
    %cst = arith.constant dense<0.000000e+00> : vector<32x288xf32>
    %13 = tpu.matmul %12, %11, %cst {dimension_numbers = #tpu.dot_dimension_numbers<[1], [0], [0], [1], [0, 0, 1, 1], [], []>} : vector<32x36xf32>, vector<36x288xf32>, vector<32x288xf32> -> vector<32x288xf32>
    %c0_4 = arith.constant 0 : index
    %c0_5 = arith.constant 0 : index
    %14 = vector.load %arg3[%c0_4, %c0_5] : memref<32x1xf32, #tpu.memory_space<vmem>>, vector<32x1xf32>
    %15 = vector.broadcast %14 : vector<32x1xf32> to vector<32x288xf32>
    %16 = arith.addf %13, %15 : vector<32x288xf32>
    %cst_6 = arith.constant 0.000000e+00 : f32
    %17 = vector.broadcast %cst_6 : f32 to vector<32x288xf32>
    %18 = arith.maximumf %16, %17 : vector<32x288xf32>
    %c0_7 = arith.constant 0 : index
    %c0_8 = arith.constant 0 : index
    %19 = vector.load %arg4[%c0_7, %c0_8] : memref<1x288xf32, #tpu.memory_space<vmem>>, vector<1x288xf32>
    %20 = vector.broadcast %19 : vector<1x288xf32> to vector<32x288xf32>
    %21 = arith.mulf %18, %20 : vector<32x288xf32>
    %cst_9 = arith.constant dense<0.000000e+00> : vector<32xf32>
    %22 = vector.multi_reduction <add>, %21, %cst_9 [1] : vector<32x288xf32> to vector<32xf32>
    %23 = vector.shape_cast %22 : vector<32xf32> to vector<32x1xf32>
    %c0_10 = arith.constant 0 : index
    %c0_11 = arith.constant 0 : index
    %24 = vector.load %arg5[%c0_10, %c0_11] : memref<32x32xf32, #tpu.memory_space<vmem>>, vector<32x32xf32>
    %25 = vector.broadcast %23 : vector<32x1xf32> to vector<32x32xf32>
    %26 = arith.mulf %25, %24 : vector<32x32xf32>
    %cst_12 = arith.constant dense<0.000000e+00> : vector<32xf32>
    %27 = vector.multi_reduction <add>, %26, %cst_12 [0] : vector<32x32xf32> to vector<32xf32>
    %28 = vector.shape_cast %27 : vector<32xf32> to vector<1x32xf32>
    %c0_13 = arith.constant 0 : index
    %c0_14 = arith.constant 0 : index
    %29 = vector.load %arg6[%c0_13, %c0_14] : memref<1x32xf32, #tpu.memory_space<vmem>>, vector<1x32xf32>
    %30 = arith.addf %28, %29 : vector<1x32xf32>
    %c0_15 = arith.constant 0 : index
    %c0_16 = arith.constant 0 : index
    %c0_17 = arith.constant 0 : index
    %31 = vector.load %arg7[%c0_15, %c0_16, %c0_17] : memref<1x1x32xf32, #tpu.memory_space<vmem>>, vector<1x1x32xf32>
    %32 = vector.shape_cast %31 : vector<1x1x32xf32> to vector<1x32xf32>
    %33 = vector.shape_cast %30 : vector<1x32xf32> to vector<1x1x32xf32>
    tpu.vector_store %arg7[%c0_15, %c0_16, %c0_17], %33 {strides = array<i32>} : memref<1x1x32xf32, #tpu.memory_space<vmem>>, vector<1x1x32xf32>,
    return
  }
  func.func @transform_0(%arg0: i32) -> (i32, i32, i32) {
    %c0_i32 = arith.constant 0 : i32
    %c0_i32_0 = arith.constant 0 : i32
    %c0_i32_1 = arith.constant 0 : i32
    return %arg0, %c0_i32, %c0_i32_0 : i32, i32, i32
  }
  func.func @transform_1(%arg0: i32) -> (i32, i32) {
    %c0_i32 = arith.constant 0 : i32
    %c0_i32_0 = arith.constant 0 : i32
    %c0_i32_1 = arith.constant 0 : i32
    return %c0_i32, %c0_i32_0 : i32, i32
  }
  func.func @transform_2(%arg0: i32) -> (i32, i32) {
    %c0_i32 = arith.constant 0 : i32
    %c0_i32_0 = arith.constant 0 : i32
    %c0_i32_1 = arith.constant 0 : i32
    return %c0_i32, %c0_i32_0 : i32, i32
  }
  func.func @transform_3(%arg0: i32) -> (i32, i32) {
    %c0_i32 = arith.constant 0 : i32
    %c0_i32_0 = arith.constant 0 : i32
    %c0_i32_1 = arith.constant 0 : i32
    return %c0_i32, %c0_i32_0 : i32, i32
  }
  func.func @transform_4(%arg0: i32) -> (i32, i32) {
    %c0_i32 = arith.constant 0 : i32
    %c0_i32_0 = arith.constant 0 : i32
    %c0_i32_1 = arith.constant 0 : i32
    return %c0_i32, %c0_i32_0 : i32, i32
  }
  func.func @transform_5(%arg0: i32) -> (i32, i32) {
    %c0_i32 = arith.constant 0 : i32
    %c0_i32_0 = arith.constant 0 : i32
    %c0_i32_1 = arith.constant 0 : i32
    return %c0_i32, %c0_i32_0 : i32, i32
  }
  func.func @transform_6(%arg0: i32) -> (i32, i32, i32) {
    %c0_i32 = arith.constant 0 : i32
    %c0_i32_0 = arith.constant 0 : i32
    %c0_i32_1 = arith.constant 0 : i32
    return %arg0, %c0_i32, %c0_i32_0 : i32, i32, i32
  }
}

</mosaic_0001>

<llo_original>
// kernel: barlow_twins_forward.1
$region0: #{barlow_twins_forward.1}
  #allocation0 [shape = 'u32[]', space=smem, size = 0x4, offset = 0x4, fixed_abs, tag = 'smem constant byte address 0x4 - core index']
  #allocation1 [shape = 'u32[144,128]{1,0:T(1,128)}', space=vmem, size = 0x12000, scoped, tag = 'internal scratch']
  %s0 = inlined_call_operand.vmem [shape: f32[4,4,326], index: 0, kind: input, shape index: {}]
  %s1 = inlined_call_operand.vmem [shape: f32[32,36], index: 1, kind: input, shape index: {}]
  %s2 = inlined_call_operand.vmem [shape: f32[32,1], index: 2, kind: input, shape index: {}]
  %s3 = inlined_call_operand.vmem [shape: f32[1,288], index: 3, kind: input, shape index: {}]
  %s4 = inlined_call_operand.vmem [shape: f32[32,32], index: 4, kind: input, shape index: {}]
  %s5 = inlined_call_operand.vmem [shape: f32[1,32], index: 5, kind: input, shape index: {}]
  %s6 = inlined_call_operand.vmem [shape: f32[4,1,32], index: 6, kind: output, shape index: {}]
  %s7 = sld [smem:[#allocation0]]
  $region57: #{barlow_twins_forward.1} parent=0
    _
  %s9 = ssub.s32 1, %s7
  %s10 = scalar_select 0, %s9, %s7
  loop: start=0, step=1, limit=6
  $region2: #{barlow_twins_forward.1} parent=0 // loop_pre_header
    _
  $region3: #{barlow_twins_forward.1} parent=0 // loop_header
    %s12 = sphi 0, %s16
    %p13 = scmp.ge.s32.totalorder %s12, 6
    %s22 = sphi 0, %s24
    %s25 = sphi 0, %s22
    %s26 = sphi 0, %s25
    %s42 = sphi 0, %s26
    %s46 = sphi 0, %s46
    %s48 = sphi 0, %s46
    %s49 = sphi 0, %s48
    %s63 = sphi 0, %s49
    %s67 = sphi 0, %s67
    %s69 = sphi 0, %s67
    %s70 = sphi 0, %s69
    %s84 = sphi 0, %s70
    %s88 = sphi 0, %s88
    %s90 = sphi 0, %s88
    %s91 = sphi 0, %s90
    %s105 = sphi 0, %s91
    %s109 = sphi 0, %s109
    %s111 = sphi 0, %s109
    %s112 = sphi 0, %s111
    %s126 = sphi 0, %s112
    %s130 = sphi 0, %s130
    %s132 = sphi 0, %s130
    %s133 = sphi 0, %s132
    %s147 = sphi 0, %s133
    %s153 = sphi 0, %s155
    %s156 = sphi 0, %s153
    %s157 = sphi 0, %s156
    %s173 = sphi 0, %s157
  $region4: #{barlow_twins_forward.1} parent=0 // loop_header_branch
    %15 = sbr.rel (%p13) target = $region8
  $region5: #{barlow_twins_forward.1} parent=0 // loop_body
    %s17 = ssub.s32 %s12, 1
    %s18 = ssub.s32 %s12, 2
    %s19 = sadd.s32 %s12, 1
    %s20 = ssub.s32 %s12, %s19
    %p21 = scmp.eq.s32.totalorder %s20, 0
    %s23 = sadd.s32 %s22, 1
    %s24 = scalar_select %p21, %s22, %s23
    %p27 = pneg %p21
    %p28 = scmp.eq.s32.totalorder %s12, 3
    %p29 = por %p27, %p28
    %p30 = scmp.ne.s32.totalorder %s22, %s25
    %p31 = scmp.eq.s32.totalorder %s12, 0
    %p32 = por %p30, %p31
    %p33 = scmp.ne.s32.totalorder %s22, %s25
    %p34 = scmp.eq.s32.totalorder %s17, 3
    %p35 = por %p33, %p34
    %p36 = scmp.ne.s32.totalorder %s25, %s26
    %p37 = scmp.eq.s32.totalorder %s17, 0
    %p38 = por %p36, %p37
    %p39 = scmp.ne.s32.totalorder %s25, %s26
    %p40 = scmp.eq.s32.totalorder %s18, 3
    %p41 = por %p39, %p40
    %p43 = scmp.ne.s32.totalorder %s26, %s42
    %p44 = scmp.eq.s32.totalorder %s18, 0
    %p45 = por %p43, %p44
    %s47 = sadd.s32 %s46, 1
    %p50 = scmp.eq.s32.totalorder %s12, 3
    %p51 = scmp.ne.s32.totalorder %s46, %s48
    %p52 = scmp.eq.s32.totalorder %s12, 0
    %p53 = por %p51, %p52
    %p54 = scmp.ne.s32.totalorder %s46, %s48
    %p55 = scmp.eq.s32.totalorder %s17, 3
    %p56 = por %p54, %p55
    %p57 = scmp.ne.s32.totalorder %s48, %s49
    %p58 = scmp.eq.s32.totalorder %s17, 0
    %p59 = por %p57, %p58
    %p60 = scmp.ne.s32.totalorder %s48, %s49
    %p61 = scmp.eq.s32.totalorder %s18, 3
    %p62 = por %p60, %p61
    %p64 = scmp.ne.s32.totalorder %s49, %s63
    %p65 = scmp.eq.s32.totalorder %s18, 0
    %p66 = por %p64, %p65
    %s68 = sadd.s32 %s67, 1
    %p71 = scmp.eq.s32.totalorder %s12, 3
    %p72 = scmp.ne.s32.totalorder %s67, %s69
    %p73 = scmp.eq.s32.totalorder %s12, 0
    %p74 = por %p72, %p73
    %p75 = scmp.ne.s32.totalorder %s67, %s69
    %p76 = scmp.eq.s32.totalorder %s17, 3
    %p77 = por %p75, %p76
    %p78 = scmp.ne.s32.totalorder %s69, %s70
    %p79 = scmp.eq.s32.totalorder %s17, 0
    %p80 = por %p78, %p79
    %p81 = scmp.ne.s32.totalorder %s69, %s70
    %p82 = scmp.eq.s32.totalorder %s18, 3
    %p83 = por %p81, %p82
    %p85 = scmp.ne.s32.totalorder %s70, %s84
    %p86 = scmp.eq.s32.totalorder %s18, 0
    %p87 = por %p85, %p86
    %s89 = sadd.s32 %s88, 1
    %p92 = scmp.eq.s32.totalorder %s12, 3
    %p93 = scmp.ne.s32.totalorder %s88, %s90
    %p94 = scmp.eq.s32.totalorder %s12, 0
    %p95 = por %p93, %p94
    %p96 = scmp.ne.s32.totalorder %s88, %s90
    %p97 = scmp.eq.s32.totalorder %s17, 3
    %p98 = por %p96, %p97
    %p99 = scmp.ne.s32.totalorder %s90, %s91
    %p100 = scmp.eq.s32.totalorder %s17, 0
    %p101 = por %p99, %p100
    %p102 = scmp.ne.s32.totalorder %s90, %s91
    %p103 = scmp.eq.s32.totalorder %s18, 3
    %p104 = por %p102, %p103
    %p106 = scmp.ne.s32.totalorder %s91, %s105
    %p107 = scmp.eq.s32.totalorder %s18, 0
    %p108 = por %p106, %p107
    %s110 = sadd.s32 %s109, 1
    %p113 = scmp.eq.s32.totalorder %s12, 3
    %p114 = scmp.ne.s32.totalorder %s109, %s111
    %p115 = scmp.eq.s32.totalorder %s12, 0
    %p116 = por %p114, %p115
    %p117 = scmp.ne.s32.totalorder %s109, %s111
    %p118 = scmp.eq.s32.totalorder %s17, 3
    %p119 = por %p117, %p118
    %p120 = scmp.ne.s32.totalorder %s111, %s112
    %p121 = scmp.eq.s32.totalorder %s17, 0
    %p122 = por %p120, %p121
    %p123 = scmp.ne.s32.totalorder %s111, %s112
    %p124 = scmp.eq.s32.totalorder %s18, 3
    %p125 = por %p123, %p124
    %p127 = scmp.ne.s32.totalorder %s112, %s126
    %p128 = scmp.eq.s32.totalorder %s18, 0
    %p129 = por %p127, %p128
    %s131 = sadd.s32 %s130, 1
    %p134 = scmp.eq.s32.totalorder %s12, 3
    %p135 = scmp.ne.s32.totalorder %s130, %s132
    %p136 = scmp.eq.s32.totalorder %s12, 0
    %p137 = por %p135, %p136
    %p138 = scmp.ne.s32.totalorder %s130, %s132
    %p139 = scmp.eq.s32.totalorder %s17, 3
    %p140 = por %p138, %p139
    %p141 = scmp.ne.s32.totalorder %s132, %s133
    %p142 = scmp.eq.s32.totalorder %s17, 0
    %p143 = por %p141, %p142
    %p144 = scmp.ne.s32.totalorder %s132, %s133
    %p145 = scmp.eq.s32.totalorder %s18, 3
    %p146 = por %p144, %p145
    %p148 = scmp.ne.s32.totalorder %s133, %s147
    %p149 = scmp.eq.s32.totalorder %s18, 0
    %p150 = por %p148, %p149
    %s151 = ssub.s32 %s12, %s19
    %p152 = scmp.eq.s32.totalorder %s151, 0
    %s154 = sadd.s32 %s153, 1
    %s155 = scalar_select %p152, %s153, %s154
    %p158 = pneg %p152
    %p159 = scmp.eq.s32.totalorder %s12, 3
    %p160 = por %p158, %p159
    %p161 = scmp.ne.s32.totalorder %s153, %s156
    %p162 = scmp.eq.s32.totalorder %s12, 0
    %p163 = por %p161, %p162
    %p164 = scmp.ne.s32.totalorder %s153, %s156
    %p165 = scmp.eq.s32.totalorder %s17, 3
    %p166 = por %p164, %p165
    %p167 = scmp.ne.s32.totalorder %s156, %s157
    %p168 = scmp.eq.s32.totalorder %s17, 0
    %p169 = por %p167, %p168
    %p170 = scmp.ne.s32.totalorder %s156, %s157
    %p171 = scmp.eq.s32.totalorder %s18, 3
    %p172 = por %p170, %p171
    %p174 = scmp.ne.s32.totalorder %s157, %s173
    %p175 = scmp.eq.s32.totalorder %s18, 0
    %p176 = por %p174, %p175
    %p177 = scmp.le.s32.totalorder 1, %s12
    %p178 = scmp.lt.s32.totalorder %s12, 5
    %p179 = pnand %p177, %p178
    %p180 = pneg %p179
    // Predicated region
    $region9: #{barlow_twins_forward.1} parent=5 // pred_check
      _
    $region10: #{barlow_twins_forward.1} parent=5 // pred_check_branch
      %182 = sbr.rel (%p179) target = $region12
    $region11: #{barlow_twins_forward.1} parent=5 // pred_region
      %s183 = ssub.s32 %s12, 1
      // Predicated region
      $region13: #{barlow_twins_forward.1} parent=11 // pred_check
        %p184 = pneg %p59
      $region14: #{barlow_twins_forward.1} parent=11 // pred_check_branch
        %186 = sbr.rel (%p184) target = $region16
      $region15: #{barlow_twins_forward.1} parent=11 // pred_region
        _
      $region16: #{barlow_twins_forward.1} parent=11 // pred_fallthru
        _
      // Predicated region
      $region17: #{barlow_twins_forward.1} parent=11 // pred_check
        %p187 = pneg %p80
      $region18: #{barlow_twins_forward.1} parent=11 // pred_check_branch
        %189 = sbr.rel (%p187) target = $region20
      $region19: #{barlow_twins_forward.1} parent=11 // pred_region
        _
      $region20: #{barlow_twins_forward.1} parent=11 // pred_fallthru
        _
      // Predicated region
      $region21: #{barlow_twins_forward.1} parent=11 // pred_check
        %p190 = pneg %p101
      $region22: #{barlow_twins_forward.1} parent=11 // pred_check_branch
        %192 = sbr.rel (%p190) target = $region24
      $region23: #{barlow_twins_forward.1} parent=11 // pred_region
        _
      $region24: #{barlow_twins_forward.1} parent=11 // pred_fallthru
        _
      // Predicated region
      $region25: #{barlow_twins_forward.1} parent=11 // pred_check
        %p193 = pneg %p122
      $region26: #{barlow_twins_forward.1} parent=11 // pred_check_branch
        %195 = sbr.rel (%p193) target = $region28
      $region27: #{barlow_twins_forward.1} parent=11 // pred_region
        _
      $region28: #{barlow_twins_forward.1} parent=11 // pred_fallthru
        _
      // Predicated region
      $region29: #{barlow_twins_forward.1} parent=11 // pred_check
        %p196 = pneg %p143
      $region30: #{barlow_twins_forward.1} parent=11 // pred_check_branch
        %198 = sbr.rel (%p196) target = $region32
      $region31: #{barlow_twins_forward.1} parent=11 // pred_region
        _
      $region32: #{barlow_twins_forward.1} parent=11 // pred_fallthru
        _
    $region12: #{barlow_twins_forward.1} parent=5 // pred_fallthru
      _
    %p199 = scmp.lt.s32.totalorder %s12, 4
    // Predicated region
    $region33: #{barlow_twins_forward.1} parent=5 // pred_check
      %p200 = pneg %p199
    $region34: #{barlow_twins_forward.1} parent=5 // pred_check_branch
      %202 = sbr.rel (%p200) target = $region36
    $region35: #{barlow_twins_forward.1} parent=5 // pred_region
      // Predicated region
      $region37: #{barlow_twins_forward.1} parent=35 // pred_check
        %p203 = pneg %p32
      $region38: #{barlow_twins_forward.1} parent=35 // pred_check_branch
        %205 = sbr.rel (%p203) target = $region40
      $region39: #{barlow_twins_forward.1} parent=35 // pred_region
        %p206 = scmp.lt.s32.totalorder %s12, 3
        %s207 = scalar_select %p206, %s12, 3
        %s208 = smul.addr %s207, 3
        %s209 = smul.addr %s208, 4
        %s210 = scalar_lea.vmem %s0, %s209
      $region40: #{barlow_twins_forward.1} parent=35 // pred_fallthru
        _
    $region36: #{barlow_twins_forward.1} parent=5 // pred_fallthru
      _
    %p211 = scmp.le.s32.totalorder 1, %s12
    %p212 = scmp.lt.s32.totalorder %s12, 5
    %p213 = pnand %p211, %p212
    %p214 = pneg %p213
    // Predicated region
    $region41: #{barlow_twins_forward.1} parent=5 // pred_check
      _
    $region42: #{barlow_twins_forward.1} parent=5 // pred_check_branch
      %216 = sbr.rel (%p213) target = $region44
    $region43: #{barlow_twins_forward.1} parent=5 // pred_region
      %s217 = ssub.s32 %s12, 1
      %p218 = scmp.lt.s32.totalorder %s17, 3
      %s219 = scalar_select %p218, %s17, 3
      %s220 = smul.addr %s219, 3
      %s221 = smul.addr %s220, 4
      %s222 = scalar_lea.vmem %s0, %s221
      %p223 = pneg %p38
      %p224 = pneg %p35
      %p225 = pneg %p59
      %p226 = pneg %p56
      %p227 = pneg %p80
      %p228 = pneg %p77
      %p229 = pneg %p101
      %p230 = pneg %p98
      %p231 = pneg %p122
      %p232 = pneg %p119
      %p233 = pneg %p143
      %p234 = pneg %p140
      %p235 = pneg %p169
      %p236 = pneg %p166
      %p237 = scmp.lt.s32.totalorder %s17, 3
      %s238 = scalar_select %p237, %s17, 3
      %s239 = scalar_lea.vmem %s6, %s238
      %p240 = scmp.lt.s32.totalorder %s17, 3
      %s241 = scalar_select %p240, %s17, 3
      %s242 = smul.addr %s241, 3
      %s243 = smul.addr %s242, 4
      %s244 = scalar_lea.vmem %s0, %s243
      %p245 = scmp.lt.s32.totalorder %s17, 3
      %s246 = scalar_select %p245, %s17, 3
      %s247 = scalar_lea.vmem %s6, %s246
      %v248 = vld [vmem:[%s244] sm:$0xff]
      %v249 = vld [vmem:[%s244 + $0x8] sm:$0xf]
      %v252 = vcombine.high %v248, %v248
      %v254 = vcombine.low %v248, %v248
      %v255 = vcombine.low %v249, %v249
      %256 = vrot.lane.b32.xlu0 %v254, 127
      %v257 = vpop.permute.xlu0 %256
      %258 = vrot.lane.b32.xlu0 %v248, 127
      %v259 = vpop.permute.xlu0 %258
      %260 = vrot.lane.b32.xlu0 %v255, 127
      %v261 = vpop.permute.xlu0 %260
      %vm262 = vcmask 1039360
      %v263 = vsel %vm262, %v257, %v259
      %v264 = vsel %vm262, %v259, %v261
      %268 = vrot.lane.b32.xlu0 %v248, 126
      %v269 = vpop.permute.xlu0 %268
      %270 = vrot.lane.b32.xlu0 %v252, 126
      %v271 = vpop.permute.xlu0 %270
      %272 = vrot.lane.b32.xlu0 %v249, 126
      %v273 = vpop.permute.xlu0 %272
      %vm274 = vcmask 1031168
      %v275 = vsel %vm274, %v269, %v271
      %v276 = vsel %vm274, %v271, %v273
      %280 = vrot.lane.b32.xlu0 %v254, 110
      %v281 = vpop.permute.xlu0 %280
      %282 = vrot.lane.b32.xlu0 %v248, 110
      %v283 = vpop.permute.xlu0 %282
      %284 = vrot.lane.b32.xlu0 %v255, 110
      %v285 = vpop.permute.xlu0 %284
      %vm286 = vcmask 900096
      %v287 = vsel %vm286, %v281, %v283
      %v288 = vsel %vm286, %v283, %v285
      %292 = vrot.lane.b32.xlu0 %v248, 109
      %v293 = vpop.permute.xlu0 %292
      %294 = vrot.lane.b32.xlu0 %v252, 109
      %v295 = vpop.permute.xlu0 %294
      %296 = vrot.lane.b32.xlu0 %v249, 109
      %v297 = vpop.permute.xlu0 %296
      %vm298 = vcmask 891904
      %v299 = vsel %vm298, %v293, %v295
      %v300 = vsel %vm298, %v295, %v297
      %304 = vrot.lane.b32.xlu0 %v254, 108
      %v305 = vpop.permute.xlu0 %304
      %306 = vrot.lane.b32.xlu0 %v248, 108
      %v307 = vpop.permute.xlu0 %306
      %308 = vrot.lane.b32.xlu0 %v255, 108
      %v309 = vpop.permute.xlu0 %308
      %vm310 = vcmask 883712
      %v311 = vsel %vm310, %v305, %v307
      %v312 = vsel %vm310, %v307, %v309
      %316 = vrot.lane.b32.xlu0 %v248, 92
      %v317 = vpop.permute.xlu0 %316
      %318 = vrot.lane.b32.xlu0 %v252, 92
      %v319 = vpop.permute.xlu0 %318
      %320 = vrot.lane.b32.xlu0 %v249, 92
      %v321 = vpop.permute.xlu0 %320
      %vm322 = vcmask 752640
      %v323 = vsel %vm322, %v317, %v319
      %v324 = vsel %vm322, %v319, %v321
      %328 = vrot.lane.b32.xlu0 %v254, 91
      %v329 = vpop.permute.xlu0 %328
      %330 = vrot.lane.b32.xlu0 %v248, 91
      %v331 = vpop.permute.xlu0 %330
      %332 = vrot.lane.b32.xlu0 %v255, 91
      %v333 = vpop.permute.xlu0 %332
      %vm334 = vcmask 744448
      %v335 = vsel %vm334, %v329, %v331
      %v336 = vsel %vm334, %v331, %v333
      %340 = vrot.lane.b32.xlu0 %v248, 90
      %v341 = vpop.permute.xlu0 %340
      %342 = vrot.lane.b32.xlu0 %v252, 90
      %v343 = vpop.permute.xlu0 %342
      %344 = vrot.lane.b32.xlu0 %v249, 90
      %v345 = vpop.permute.xlu0 %344
      %vm346 = vcmask 736256
      %v347 = vsel %vm346, %v341, %v343
      %v348 = vsel %vm346, %v343, %v345
      %vm349 = vcmask 1043456
      %v350 = vsel %vm349, %v248, %v263
      %v351 = vsel %vm349, %v252, %v264
      %v352 = vsel %vm349, %v249, %v261
      %v353 = vsel %vm349, %v275, %v287
      %v354 = vsel %vm349, %v276, %v288
      %v355 = vsel %vm349, %v273, %v285
      %v356 = vsel %vm349, %v299, %v311
      %v357 = vsel %vm349, %v300, %v312
      %v358 = vsel %vm349, %v297, %v309
      %v359 = vsel %vm349, %v323, %v335
      %v360 = vsel %vm349, %v324, %v336
      %v361 = vsel %vm349, %v321, %v333
      %v362 = vld [vmem:[%s1] sm:$0xff]
      %v363 = vld [vmem:[%s1 + $0x8] sm:$0xff]
      %v364 = vld [vmem:[%s1 + $0x10] sm:$0xff]
      %v365 = vld [vmem:[%s1 + $0x18] sm:$0xff]
      %v366 = vld [vmem:[%s2] sm:$0xff]
      %v367 = vld [vmem:[%s2 + $0x8] sm:$0xff]
      %v368 = vld [vmem:[%s2 + $0x10] sm:$0xff]
      %v369 = vld [vmem:[%s2 + $0x18] sm:$0xff]
      %371 = vset.pattern.permute.xlu0 0
      %372 = vperm.xlu0 %371, %v366
      %v373 = vpop.permute.xlu0 %372
      %376 = vset.pattern.permute.xlu0 0
      %377 = vperm.xlu0 %376, %v367
      %v378 = vpop.permute.xlu0 %377
      %381 = vset.pattern.permute.xlu0 0
      %382 = vperm.xlu0 %381, %v368
      %v383 = vpop.permute.xlu0 %382
      %386 = vset.pattern.permute.xlu0 0
      %387 = vperm.xlu0 %386, %v369
      %v388 = vpop.permute.xlu0 %387
      %vm390 = vcmask 293888
      %v392 = vsel %vm390, %v362, 0
      %v395 = vsel %vm390, %v363, 0
      %v398 = vsel %vm390, %v364, 0
      %v401 = vsel %vm390, %v365, 0
      %v403 = vsel %vm349, %v347, 0
      %v405 = vsel %vm349, %v348, 0
      %v407 = vsel %vm349, %v345, 0
      %409 = vmatprep.subr.mxu0 %v351
      %410 = vmatpush1.msra.mxu0 %v350
      %411 = vmatprep.subr.mxu0 %v354
      %412 = vmatpush1.msra.mxu0 %v353
      %413 = vmatprep.subr.mxu0 %v357
      %414 = vmatpush1.msra.mxu0 %v356
      %415 = vmatprep.subr.mxu0 %v360
      %416 = vmatpush1.msra.mxu0 %v359
      %417 = vmatprep.subr.mxu0 %v405
      %418 = vmatpush1.msra.mxu0 %v403
      %419 = vmatprep.subr.mxu0 0.0
      %420 = vmatpush1.msra.mxu0 0.0
      %421 = vmatprep.subr.mxu0 0.0
      %422 = vmatpush1.msra.mxu0 0.0
      %423 = vmatprep.subr.mxu0 0.0
      %424 = vmatpush1.msra.mxu0 0.0
      %425 = vmatprep.subr.mxu0 0.0
      %426 = vmatpush1.msra.mxu0 0.0
      %427 = vmatprep.subr.mxu0 0.0
      %428 = vmatpush1.msra.mxu0 0.0
      %429 = vmatprep.subr.mxu0 0.0
      %430 = vmatpush1.msra.mxu0 0.0
      %431 = vmatprep.subr.mxu0 0.0
      %432 = vmatpush1.msra.mxu0 0.0
      %433 = vmatprep.subr.mxu0 0.0
      %434 = vmatpush1.msra.mxu0 0.0
      %435 = vmatprep.subr.mxu0 0.0
      %436 = vmatpush1.msra.mxu0 0.0
      %437 = vmatprep.subr.mxu0 0.0
      %438 = vmatpush1.msra.mxu0 0.0
      %439 = vmatprep.subr.mxu0 0.0
      %440 = vmatpush1.msra.mxu0 0.0
      %441 = vmatprep.subr.mxu0 0.0
      %442 = vmatpush1.msra.mxu0 0.0
      %443 = vmatprep.subr.mxu0 0.0
      %444 = vmatpush1.msra.mxu0 0.0
      %445 = vmatprep.subr.mxu0 0.0
      %446 = vmatpush1.msra.mxu0 0.0
      %447 = vmatprep.subr.mxu0 0.0
      %448 = vmatpush1.msra.mxu0 0.0
      %449 = vmatprep.subr.mxu0 0.0
      %450 = vmatpush1.msra.mxu0 0.0
      %451 = vmatprep.subr.mxu0 0.0
      %452 = vmatpush1.msra.mxu0 0.0
      %453 = vmatprep.subr.mxu0 0.0
      %454 = vmatpush1.msra.mxu0 0.0
      %455 = vmatprep.subr.mxu0 0.0
      %456 = vmatpush1.msra.mxu0 0.0
      %457 = vmatprep.subr.mxu0 0.0
      %458 = vmatpush1.msra.mxu0 0.0
      %459 = vmatprep.subr.mxu0 0.0
      %460 = vmatpush1.msra.mxu0 0.0
      %461 = vmatprep.subr.mxu0 0.0
      %462 = vmatpush1.msra.mxu0 0.0
      %463 = vmatprep.subr.mxu0 0.0
      %464 = vmatpush1.msra.mxu0 0.0
      %465 = vmatprep.subr.mxu0 0.0
      %466 = vmatpush1.msra.mxu0 0.0
      %467 = vmatprep.subr.mxu0 0.0
      %468 = vmatpush1.msra.mxu0 0.0
      %469 = vmatprep.subr.mxu0 0.0
      %470 = vmatpush1.msra.mxu0 0.0
      %471 = vmatprep.subr.mxu0 0.0
      %472 = vmatpush1.msra.mxu0 0.0
      %473 = vmatprep.mubr.f32.mxu0 0.0
      %474 = vmatmul.mubr.f32.gmra.mrb[0].mxu0 %v392
      %v475 = vpop.f32.mrb[0].mxu0
      %v476 = vadd.f32 %v373, %v475
      %v477 = vpop.f32.mrb[0].mxu0
      %v478 = vadd.f32 %v373, %v477
      %479 = vmatprep.mubr.f32.mxu0 0.0
      %480 = vmatmul.mubr.f32.gmra.mrb[0].mxu0 %v395
      %v481 = vpop.f32.mrb[0].mxu0
      %v482 = vadd.f32 %v378, %v481
      %v483 = vpop.f32.mrb[0].mxu0
      %v484 = vadd.f32 %v378, %v483
      %485 = vmatprep.mubr.f32.mxu0 0.0
      %486 = vmatmul.mubr.f32.gmra.mrb[0].mxu0 %v398
      %v487 = vpop.f32.mrb[0].mxu0
      %v488 = vadd.f32 %v383, %v487
      %v489 = vpop.f32.mrb[0].mxu0
      %v490 = vadd.f32 %v383, %v489
      %491 = vmatprep.mubr.f32.mxu0 0.0
      %492 = vmatmul.mubr.f32.gmra.mrb[0].mxu0 %v401
      %v493 = vpop.f32.mrb[0].mxu0
      %v494 = vadd.f32 %v388, %v493
      %v495 = vpop.f32.mrb[0].mxu0
      %v496 = vadd.f32 %v388, %v495
      %497 = vdwg.mxu0
      %498 = vmatprep.subr.mxu0 0.0
      %499 = vmatpush1.msra.mxu0 %v352
      %500 = vmatprep.subr.mxu0 0.0
      %501 = vmatpush1.msra.mxu0 %v355
      %502 = vmatprep.subr.mxu0 0.0
      %503 = vmatpush1.msra.mxu0 %v358
      %504 = vmatprep.subr.mxu0 0.0
      %505 = vmatpush1.msra.mxu0 %v361
      %506 = vmatprep.subr.mxu0 0.0
      %507 = vmatpush1.msra.mxu0 %v407
      %508 = vmatprep.subr.mxu0 0.0
      %509 = vmatpush1.msra.mxu0 0.0
      %510 = vmatprep.subr.mxu0 0.0
      %511 = vmatpush1.msra.mxu0 0.0
      %512 = vmatprep.subr.mxu0 0.0
      %513 = vmatpush1.msra.mxu0 0.0
      %514 = vmatprep.subr.mxu0 0.0
      %515 = vmatpush1.msra.mxu0 0.0
      %516 = vmatprep.subr.mxu0 0.0
      %517 = vmatpush1.msra.mxu0 0.0
      %518 = vmatprep.subr.mxu0 0.0
      %519 = vmatpush1.msra.mxu0 0.0
      %520 = vmatprep.subr.mxu0 0.0
      %521 = vmatpush1.msra.mxu0 0.0
      %522 = vmatprep.subr.mxu0 0.0
      %523 = vmatpush1.msra.mxu0 0.0
      %524 = vmatprep.subr.mxu0 0.0
      %525 = vmatpush1.msra.mxu0 0.0
      %526 = vmatprep.subr.mxu0 0.0
      %527 = vmatpush1.msra.mxu0 0.0
      %528 = vmatprep.subr.mxu0 0.0
      %529 = vmatpush1.msra.mxu0 0.0
      %530 = vmatprep.subr.mxu0 0.0
      %531 = vmatpush1.msra.mxu0 0.0
      %532 = vmatprep.subr.mxu0 0.0
      %533 = vmatpush1.msra.mxu0 0.0
      %534 = vmatprep.subr.mxu0 0.0
      %535 = vmatpush1.msra.mxu0 0.0
      %536 = vmatprep.subr.mxu0 0.0
      %537 = vmatpush1.msra.mxu0 0.0
      %538 = vmatprep.subr.mxu0 0.0
      %539 = vmatpush1.msra.mxu0 0.0
      %540 = vmatprep.subr.mxu0 0.0
      %541 = vmatpush1.msra.mxu0 0.0
      %542 = vmatprep.subr.mxu0 0.0
      %543 = vmatpush1.msra.mxu0 0.0
      %544 = vmatprep.subr.mxu0 0.0
      %545 = vmatpush1.msra.mxu0 0.0
      %546 = vmatprep.subr.mxu0 0.0
      %547 = vmatpush1.msra.mxu0 0.0
      %548 = vmatprep.subr.mxu0 0.0
      %549 = vmatpush1.msra.mxu0 0.0
      %550 = vmatprep.subr.mxu0 0.0
      %551 = vmatpush1.msra.mxu0 0.0
      %552 = vmatprep.subr.mxu0 0.0
      %553 = vmatpush1.msra.mxu0 0.0
      %554 = vmatprep.subr.mxu0 0.0
      %555 = vmatpush1.msra.mxu0 0.0
      %556 = vmatprep.subr.mxu0 0.0
      %557 = vmatpush1.msra.mxu0 0.0
      %558 = vmatprep.subr.mxu0 0.0
      %559 = vmatpush1.msra.mxu0 0.0
      %560 = vmatprep.subr.mxu0 0.0
      %561 = vmatpush1.msra.mxu0 0.0
      %562 = vmatprep.mubr.f32.mxu0 0.0
      %563 = vmatmul.mubr.f32.gmra.mrb[0].mxu0 %v392
      %v564 = vpop.f32.mrb[0].mxu0
      %v565 = vadd.f32 %v373, %v564
      %v566 = vpop.f32.mrb[0].mxu0
      %567 = vmatprep.mubr.f32.mxu0 0.0
      %568 = vmatmul.mubr.f32.gmra.mrb[0].mxu0 %v395
      %v569 = vpop.f32.mrb[0].mxu0
      %v570 = vadd.f32 %v378, %v569
      %v571 = vpop.f32.mrb[0].mxu0
      %572 = vmatprep.mubr.f32.mxu0 0.0
      %573 = vmatmul.mubr.f32.gmra.mrb[0].mxu0 %v398
      %v574 = vpop.f32.mrb[0].mxu0
      %v575 = vadd.f32 %v383, %v574
      %v576 = vpop.f32.mrb[0].mxu0
      %577 = vmatprep.mubr.f32.mxu0 0.0
      %578 = vmatmul.mubr.f32.gmra.mrb[0].mxu0 %v401
      %v579 = vpop.f32.mrb[0].mxu0
      %v580 = vadd.f32 %v388, %v579
      %v581 = vpop.f32.mrb[0].mxu0
      %582 = vdwg.mxu0
      %v583 = vmax.f32 %v476, 0.0
      %v584 = vmax.f32 %v478, 0.0
      %v585 = vmax.f32 %v565, 0.0
      %v586 = vmax.f32 %v482, 0.0
      %v587 = vmax.f32 %v484, 0.0
      %v588 = vmax.f32 %v570, 0.0
      %v589 = vmax.f32 %v488, 0.0
      %v590 = vmax.f32 %v490, 0.0
      %v591 = vmax.f32 %v575, 0.0
      %v592 = vmax.f32 %v494, 0.0
      %v593 = vmax.f32 %v496, 0.0
      %v594 = vmax.f32 %v580, 0.0
      %v595 = vld [vmem:[%s3] sm:$0x7]
      %v597 = vlaneseq
      %v598 = vshrl.u32 %v597, 7
      %v599 = vsub.s32 0, %v598
      %v600 = vrot.slane %v595, %v599
      %v601 = vlaneseq
      %v602 = vshrl.u32 %v601, 7
      %v603 = vsub.s32 1, %v602
      %v604 = vrot.slane %v595, %v603
      %v605 = vlaneseq
      %v606 = vshrl.u32 %v605, 7
      %v607 = vsub.s32 2, %v606
      %v608 = vrot.slane %v595, %v607
      %v612 = vmul.f32 %v583, %v600
      %v613 = vmul.f32 %v584, %v604
      %v614 = vmul.f32 %v585, %v608
      %v615 = vmul.f32 %v586, %v600
      %v616 = vmul.f32 %v587, %v604
      %v617 = vmul.f32 %v588, %v608
      %v618 = vmul.f32 %v589, %v600
      %v619 = vmul.f32 %v590, %v604
      %v620 = vmul.f32 %v591, %v608
      %v621 = vmul.f32 %v592, %v600
      %v622 = vmul.f32 %v593, %v604
      %v623 = vmul.f32 %v594, %v608
      %v624 = vadd.f32 %v612, %v613
      %vm625 = vcmask 261120
      %v626 = vsel %vm625, %v614, 0.0
      %v627 = vadd.f32 %v624, %v626
      %628 = vadd.xlane.f32.xlu0 %v627
      %v629 = vpop.xlane.xlu0 %628
      %v630 = vadd.f32 %v615, %v616
      %v631 = vsel %vm625, %v617, 0.0
      %v632 = vadd.f32 %v630, %v631
      %633 = vadd.xlane.f32.xlu0 %v632
      %v634 = vpop.xlane.xlu0 %633
      %v635 = vadd.f32 %v618, %v619
      %v636 = vsel %vm625, %v620, 0.0
      %v637 = vadd.f32 %v635, %v636
      %638 = vadd.xlane.f32.xlu0 %v637
      %v639 = vpop.xlane.xlu0 %638
      %v640 = vadd.f32 %v621, %v622
      %v641 = vsel %vm625, %v623, 0.0
      %v642 = vadd.f32 %v640, %v641
      %643 = vadd.xlane.f32.xlu0 %v642
      %v644 = vpop.xlane.xlu0 %643
      %v645 = vld [vmem:[%s4] sm:$0xff]
      %v646 = vld [vmem:[%s4 + $0x8] sm:$0xff]
      %v647 = vld [vmem:[%s4 + $0x10] sm:$0xff]
      %v648 = vld [vmem:[%s4 + $0x18] sm:$0xff]
      %v649 = vmul.f32 %v629, %v645
      %v650 = vmul.f32 %v634, %v646
      %v651 = vmul.f32 %v639, %v647
      %v652 = vmul.f32 %v644, %v648
      %v653 = vsel %vm625, %v649, 0.0
      %v654 = vsel %vm625, %v650, 0.0
      %v655 = vadd.f32 %v653, %v654
      %v656 = vsel %vm625, %v651, 0.0
      %v657 = vadd.f32 %v655, %v656
      %v658 = vsel %vm625, %v652, 0.0
      %v659 = vadd.f32 %v657, %v658
      %v660 = vrot.slane %v659, 4
      %v661 = vadd.f32 %v659, %v660
      %v662 = vrot.slane %v661, 2
      %v663 = vadd.f32 %v661, %v662
      %v664 = vrot.slane %v663, 1
      %v665 = vadd.f32 %v663, %v664
      %v666 = vld [vmem:[%s5] sm:$0x1]
      %v667 = vadd.f32 %v665, %v666
      %vm668 = vcmask 253952
      %669 = vst.msk [vmem:[%s247] sm:$0x1] %vm668, %v667
      %p670 = scmp.lt.s32.totalorder %s17, 3
      %s671 = scalar_select %p670, %s17, 3
      %s672 = scalar_lea.vmem %s6, %s671
      // Predicated region
      $region45: #{barlow_twins_forward.1} parent=43 // pred_check
        %p673 = pneg %p166
      $region46: #{barlow_twins_forward.1} parent=43 // pred_check_branch
        %675 = sbr.rel (%p673) target = $region48
      $region47: #{barlow_twins_forward.1} parent=43 // pred_region
        _
      $region48: #{barlow_twins_forward.1} parent=43 // pred_fallthru
        _
    $region44: #{barlow_twins_forward.1} parent=5 // pred_fallthru
      _
    %p676 = scmp.le.s32.totalorder 2, %s12
    // Predicated region
    $region49: #{barlow_twins_forward.1} parent=5 // pred_check
      %p677 = pneg %p676
    $region50: #{barlow_twins_forward.1} parent=5 // pred_check_branch
      %679 = sbr.rel (%p677) target = $region52
    $region51: #{barlow_twins_forward.1} parent=5 // pred_region
      %s680 = ssub.s32 %s12, 2
      // Predicated region
      $region53: #{barlow_twins_forward.1} parent=51 // pred_check
        %p681 = pneg %p172
      $region54: #{barlow_twins_forward.1} parent=51 // pred_check_branch
        %683 = sbr.rel (%p681) target = $region56
      $region55: #{barlow_twins_forward.1} parent=51 // pred_region
        %p684 = scmp.lt.s32.totalorder %s18, 3
        %s685 = scalar_select %p684, %s18, 3
        %s686 = scalar_lea.vmem %s6, %s685
      $region56: #{barlow_twins_forward.1} parent=51 // pred_fallthru
        _
    $region52: #{barlow_twins_forward.1} parent=5 // pred_fallthru
      _
  $region6: #{barlow_twins_forward.1} parent=0 // loop_footer
    %s16 = sadd.s32 1, %s12
  $region7: #{barlow_twins_forward.1} parent=0 // loop_footer_branch
    %11 = sbr.rel target = $region3
  $region8: #{barlow_twins_forward.1} parent=0 // loop_exit
    _

</llo_original>
